<compile_context>
chip_gen: v7x
topology: tpu7x:2x2x1
jax: 0.10.0
libtpu: 0.0.40
codegen_flags: <defaults>
</compile_context>

<pallas_src>
import functools

import jax
import jax.numpy as jnp
from jax.experimental import pallas as pl
from jax.experimental.pallas import tpu as pltpu

N_OUT = 9  # Linear(100, 9) -> true output width (rest of the 128 lanes is padding)

_VMEM_PIPE_BUDGET = 40 * 1024 * 1024   # x/out double buffers + resident weights
_VMEM_LIMIT = 48 * 1024 * 1024         # leaves headroom inside v7x's 64 MiB VMEM


def _round_up(x, m):
    return ((x + m - 1) // m) * m


def _mlp_kernel(x_ref,
                w1_ref, b1_ref,
                w2_ref, b2_ref,
                w3_ref, b3_ref,
                w4_ref, b4_ref,
                o_ref):
    """Four Linear layers, ReLU after the first three (matches nn.Sequential).

    x arrives as float32 (no separate XLA convert pass); it is cast to bf16
    here so the MXU runs bf16 with f32 accumulation.  Weights are bf16
    (in_features, out_features); biases f32 (1, out_features).  Output is bf16.
    """
    x = x_ref[...].astype(jnp.bfloat16)

    h = jnp.dot(x, w1_ref[...], preferred_element_type=jnp.float32)
    h = jnp.maximum(h + b1_ref[...], 0.0)

    h = jnp.dot(h.astype(w2_ref.dtype), w2_ref[...],
                preferred_element_type=jnp.float32)
    h = jnp.maximum(h + b2_ref[...], 0.0)

    h = jnp.dot(h.astype(w3_ref.dtype), w3_ref[...],
                preferred_element_type=jnp.float32)
    h = jnp.maximum(h + b3_ref[...], 0.0)

    h = jnp.dot(h.astype(w4_ref.dtype), w4_ref[...],
                preferred_element_type=jnp.float32)
    o_ref[...] = (h + b4_ref[...]).astype(o_ref.dtype)


def init_params(width, key):
    """Deterministic init matching torch.nn.Linear shapes (stored transposed).

    PyTorch Linear(in, out) holds W of shape (out, in); we store W.T = (in, out)
    plus a (1, out) bias.  Returned in float32, un-padded.
    """
    dims = [384 * width, 384 * width // 8, 384 * width // 16, 100, N_OUT]
    params = []
    for i in range(4):
        fan_in, fan_out = dims[i], dims[i + 1]
        key, kw, kb = jax.random.split(key, 3)
        bound = 1.0 / jnp.sqrt(jnp.float32(fan_in))
        w = jax.random.uniform(kw, (fan_in, fan_out), jnp.float32, -bound, bound)
        b = jax.random.uniform(kb, (1, fan_out), jnp.float32, -bound, bound)
        params.append((w, b))
    return params


def pad_params(params):
    """Zero-pad feature dims to multiples of 128; weights -> bf16, biases f32.

    Padded hidden columns have zero weights AND zero bias, so ReLU keeps them
    at exactly 0 and the zero-padded rows of the next layer contribute nothing.
    """
    packed = []
    prev_out_pad = None
    for (w, b) in params:
        fan_in, fan_out = w.shape
        in_pad = prev_out_pad if prev_out_pad is not None else _round_up(fan_in, 128)
        out_pad = _round_up(fan_out, 128)
        wp = jnp.zeros((in_pad, out_pad), jnp.float32).at[:fan_in, :fan_out].set(w)
        bp = jnp.zeros((1, out_pad), jnp.float32).at[:, :fan_out].set(b)
        packed.append((wp.astype(jnp.bfloat16), bp))
        prev_out_pad = out_pad
    return packed


@functools.partial(jax.jit, static_argnames=("width",))
def mlp3_forward(x, padded_params, *, width):
    """Pallas implementation of MultiLayerPerceptron3.forward.

    x: (B, width, 384) float32  ->  returns (B, 9) float32
    padded_params: output of pad_params(init_params(...)).
    """
    B = x.shape[0]
    D = x.shape[2] * width                    # 384*width, always a multiple of 128
    assert D % 128 == 0
    # Row-major collapse of the trailing dims: metadata-only, no extra HBM pass.
    x2d = jnp.reshape(x, (B, D))              # stays float32

    out_pad = padded_params[-1][0].shape[1]   # 128
    flat_params = [a for wb in padded_params for a in wb]
    w_bytes = sum(w.size * 2 + b.size * 4 for (w, b) in padded_params)

    # ---- VMEM-aware batch-tile selection --------------------------------
    # Per-row pipeline cost: f32 x double-buffer + bf16 out double-buffer.
    per_row = 2 * D * 4 + 2 * out_pad * 2
    max_tb = max(16, ((_VMEM_PIPE_BUDGET - w_bytes) // per_row) // 16 * 16)
    if B >= 64:
        # Keep >= ~4 grid steps so v7x megacore splits the batch axis and the
        # DMA/compute pipeline stays full; cap at 2048 rows / VMEM budget.
        TB = max(16, min(2048, max_tb, _round_up(pl.cdiv(B, 4), 16)))
    else:
        # Tiny batch: one exactly-sized tile (block == full array dim is legal).
        TB = B
    grid = (pl.cdiv(B, TB),)   # partial last tile: OOB writes are masked by Pallas

    # Weights/biases: constant index_maps -> fetched once, resident in VMEM.
    # (Single-buffering them via pipeline_mode would reclaim a little more
    #  VMEM at large width; negligible at width=2 so left default.)
    param_specs = []
    for (w, b) in padded_params:
        param_specs.append(pl.BlockSpec(w.shape, lambda i: (0, 0)))
        param_specs.append(pl.BlockSpec(b.shape, lambda i: (0, 0)))

    # Advisory cost estimate (f32 x read, bf16 out write, bf16 weights).
    flops = sum(2 * B * w.shape[0] * w.shape[1] for (w, _) in padded_params)
    bytes_accessed = B * D * 4 + B * out_pad * 2 + w_bytes

    out = pl.pallas_call(
        _mlp_kernel,
        out_shape=jax.ShapeDtypeStruct((B, out_pad), jnp.bfloat16),
        grid_spec=pltpu.PrefetchScalarGridSpec(
            num_scalar_prefetch=0,
            grid=grid,
            in_specs=[pl.BlockSpec((TB, D), lambda i: (i, 0))] + param_specs,
            out_specs=pl.BlockSpec((TB, out_pad), lambda i: (i, 0)),
        ),
        compiler_params=pltpu.CompilerParams(
            dimension_semantics=("parallel",),
            vmem_limit_bytes=_VMEM_LIMIT,
        ),
        cost_estimate=pl.CostEstimate(
            flops=flops, transcendentals=0, bytes_accessed=bytes_accessed),
    )(x2d, *flat_params)

    return out[:, :N_OUT].astype(jnp.float32)


if __name__ == "__main__":
    width = 2                      # hidden sizes: 768 -> 96 -> 48 -> 100 -> 9
    batch = 2

    key = jax.random.PRNGKey(0)
    key, k_x, k_p = jax.random.split(key, 3)

    x = jax.random.normal(k_x, (batch, width, 384), jnp.float32)
    params = init_params(width, k_p)
    padded = pad_params(params)

    y = mlp3_forward(x, padded, width=width)
    y = jax.block_until_ready(y)
    assert y.shape == (batch, N_OUT)

    # Reference mirroring the kernel's bf16-weights / f32-accumulate arithmetic
    # (including the final bf16 store).
    ref = jnp.reshape(x, (batch, 384 * width)).astype(jnp.bfloat16)
    for i, (w, b) in enumerate(params):
        ref = jnp.dot(ref, w.astype(jnp.bfloat16),
                      preferred_element_type=jnp.float32) + b
        if i < 3:
            ref = jnp.maximum(ref, 0.0).astype(jnp.bfloat16)
    ref = ref.astype(jnp.bfloat16).astype(jnp.float32)
    assert jnp.allclose(y, ref, atol=2e-2, rtol=2e-2)

    # Looser sanity check against the pure-f32 math of the original module.
    ref32 = jnp.reshape(x, (batch, 384 * width))
    for i, (w, b) in enumerate(params):
        ref32 = ref32 @ w + b
        if i < 3:
            ref32 = jnp.maximum(ref32, 0.0)
    assert jnp.allclose(y, ref32, atol=1e-1, rtol=1e-1)

    print("KERNEL_OK")
</pallas_src>

<mosaic_0001>
module attributes {stable_mosaic.version = 11 : i64} {
  func.func @_mlp_kernel(%arg0: i32, %arg1: memref<2x768xf32, #tpu.memory_space<vmem>>, %arg2: memref<768x128xbf16, #tpu.memory_space<vmem>>, %arg3: memref<1x128xf32, #tpu.memory_space<vmem>>, %arg4: memref<128x128xbf16, #tpu.memory_space<vmem>>, %arg5: memref<1x128xf32, #tpu.memory_space<vmem>>, %arg6: memref<128x128xbf16, #tpu.memory_space<vmem>>, %arg7: memref<1x128xf32, #tpu.memory_space<vmem>>, %arg8: memref<128x128xbf16, #tpu.memory_space<vmem>>, %arg9: memref<1x128xf32, #tpu.memory_space<vmem>>, %arg10: memref<2x128xbf16, #tpu.memory_space<vmem>>) attributes {dimension_semantics = [#tpu.dimension_semantics<parallel>], iteration_bounds = array<i64: 1>, scalar_prefetch = 0 : i64, scratch_operands = 0 : i64, tpu.core_type = #tpu.core_type<tc>, window_params = [{transform_indices = @transform_0, window_bounds = array<i64: 2, 768>}, {pipeline_mode = #tpu.pipeline_mode<synchronous>, transform_indices = @transform_1, window_bounds = array<i64: 768, 128>}, {pipeline_mode = #tpu.pipeline_mode<synchronous>, transform_indices = @transform_2, window_bounds = array<i64: 1, 128>}, {pipeline_mode = #tpu.pipeline_mode<synchronous>, transform_indices = @transform_3, window_bounds = array<i64: 128, 128>}, {pipeline_mode = #tpu.pipeline_mode<synchronous>, transform_indices = @transform_4, window_bounds = array<i64: 1, 128>}, {pipeline_mode = #tpu.pipeline_mode<synchronous>, transform_indices = @transform_5, window_bounds = array<i64: 128, 128>}, {pipeline_mode = #tpu.pipeline_mode<synchronous>, transform_indices = @transform_6, window_bounds = array<i64: 1, 128>}, {pipeline_mode = #tpu.pipeline_mode<synchronous>, transform_indices = @transform_7, window_bounds = array<i64: 128, 128>}, {pipeline_mode = #tpu.pipeline_mode<synchronous>, transform_indices = @transform_8, window_bounds = array<i64: 1, 128>}, {transform_indices = @transform_9, window_bounds = array<i64: 2, 128>}]} {
    %c0 = arith.constant 0 : index
    %c0_0 = arith.constant 0 : index
    %0 = vector.load %arg1[%c0, %c0_0] : memref<2x768xf32, #tpu.memory_space<vmem>>, vector<2x768xf32>
    %1 = arith.truncf %0 : vector<2x768xf32> to vector<2x768xbf16>
    %c0_1 = arith.constant 0 : index
    %c0_2 = arith.constant 0 : index
    %2 = vector.load %arg2[%c0_1, %c0_2] : memref<768x128xbf16, #tpu.memory_space<vmem>>, vector<768x128xbf16>
    %cst = arith.constant dense<0.000000e+00> : vector<2x128xf32>
    %3 = tpu.matmul %1, %2, %cst {dimension_numbers = #tpu.dot_dimension_numbers<[1], [0], [0], [1], [0, 0, 1, 1], [], []>} : vector<2x768xbf16>, vector<768x128xbf16>, vector<2x128xf32> -> vector<2x128xf32>
    %c0_3 = arith.constant 0 : index
    %c0_4 = arith.constant 0 : index
    %4 = vector.load %arg3[%c0_3, %c0_4] : memref<1x128xf32, #tpu.memory_space<vmem>>, vector<1x128xf32>
    %5 = vector.broadcast %4 : vector<1x128xf32> to vector<2x128xf32>
    %6 = arith.addf %3, %5 : vector<2x128xf32>
    %cst_5 = arith.constant 0.000000e+00 : f32
    %7 = vector.broadcast %cst_5 : f32 to vector<2x128xf32>
    %8 = arith.maximumf %6, %7 : vector<2x128xf32>
    %9 = arith.truncf %8 : vector<2x128xf32> to vector<2x128xbf16>
    %c0_6 = arith.constant 0 : index
    %c0_7 = arith.constant 0 : index
    %10 = vector.load %arg4[%c0_6, %c0_7] : memref<128x128xbf16, #tpu.memory_space<vmem>>, vector<128x128xbf16>
    %cst_8 = arith.constant dense<0.000000e+00> : vector<2x128xf32>
    %11 = tpu.matmul %9, %10, %cst_8 {dimension_numbers = #tpu.dot_dimension_numbers<[1], [0], [0], [1], [0, 0, 1, 1], [], []>} : vector<2x128xbf16>, vector<128x128xbf16>, vector<2x128xf32> -> vector<2x128xf32>
    %c0_9 = arith.constant 0 : index
    %c0_10 = arith.constant 0 : index
    %12 = vector.load %arg5[%c0_9, %c0_10] : memref<1x128xf32, #tpu.memory_space<vmem>>, vector<1x128xf32>
    %13 = vector.broadcast %12 : vector<1x128xf32> to vector<2x128xf32>
    %14 = arith.addf %11, %13 : vector<2x128xf32>
    %cst_11 = arith.constant 0.000000e+00 : f32
    %15 = vector.broadcast %cst_11 : f32 to vector<2x128xf32>
    %16 = arith.maximumf %14, %15 : vector<2x128xf32>
    %17 = arith.truncf %16 : vector<2x128xf32> to vector<2x128xbf16>
    %c0_12 = arith.constant 0 : index
    %c0_13 = arith.constant 0 : index
    %18 = vector.load %arg6[%c0_12, %c0_13] : memref<128x128xbf16, #tpu.memory_space<vmem>>, vector<128x128xbf16>
    %cst_14 = arith.constant dense<0.000000e+00> : vector<2x128xf32>
    %19 = tpu.matmul %17, %18, %cst_14 {dimension_numbers = #tpu.dot_dimension_numbers<[1], [0], [0], [1], [0, 0, 1, 1], [], []>} : vector<2x128xbf16>, vector<128x128xbf16>, vector<2x128xf32> -> vector<2x128xf32>
    %c0_15 = arith.constant 0 : index
    %c0_16 = arith.constant 0 : index
    %20 = vector.load %arg7[%c0_15, %c0_16] : memref<1x128xf32, #tpu.memory_space<vmem>>, vector<1x128xf32>
    %21 = vector.broadcast %20 : vector<1x128xf32> to vector<2x128xf32>
    %22 = arith.addf %19, %21 : vector<2x128xf32>
    %cst_17 = arith.constant 0.000000e+00 : f32
    %23 = vector.broadcast %cst_17 : f32 to vector<2x128xf32>
    %24 = arith.maximumf %22, %23 : vector<2x128xf32>
    %25 = arith.truncf %24 : vector<2x128xf32> to vector<2x128xbf16>
    %c0_18 = arith.constant 0 : index
    %c0_19 = arith.constant 0 : index
    %26 = vector.load %arg8[%c0_18, %c0_19] : memref<128x128xbf16, #tpu.memory_space<vmem>>, vector<128x128xbf16>
    %cst_20 = arith.constant dense<0.000000e+00> : vector<2x128xf32>
    %27 = tpu.matmul %25, %26, %cst_20 {dimension_numbers = #tpu.dot_dimension_numbers<[1], [0], [0], [1], [0, 0, 1, 1], [], []>} : vector<2x128xbf16>, vector<128x128xbf16>, vector<2x128xf32> -> vector<2x128xf32>
    %c0_21 = arith.constant 0 : index
    %c0_22 = arith.constant 0 : index
    %28 = vector.load %arg9[%c0_21, %c0_22] : memref<1x128xf32, #tpu.memory_space<vmem>>, vector<1x128xf32>
    %29 = vector.broadcast %28 : vector<1x128xf32> to vector<2x128xf32>
    %30 = arith.addf %27, %29 : vector<2x128xf32>
    %31 = arith.truncf %30 : vector<2x128xf32> to vector<2x128xbf16>
    %c0_23 = arith.constant 0 : index
    %c0_24 = arith.constant 0 : index
    %32 = vector.load %arg10[%c0_23, %c0_24] : memref<2x128xbf16, #tpu.memory_space<vmem>>, vector<2x128xbf16>
    tpu.vector_store %arg10[%c0_23, %c0_24], %31 {strides = array<i32>} : memref<2x128xbf16, #tpu.memory_space<vmem>>, vector<2x128xbf16>,
    return
  }
  func.func @transform_0(%arg0: i32) -> (i32, i32) {
    %c0_i32 = arith.constant 0 : i32
    %c0_i32_0 = arith.constant 0 : i32
    return %arg0, %c0_i32 : i32, i32
  }
  func.func @transform_1(%arg0: i32) -> (i32, i32) {
    %c0_i32 = arith.constant 0 : i32
    %c0_i32_0 = arith.constant 0 : i32
    %c0_i32_1 = arith.constant 0 : i32
    return %c0_i32, %c0_i32_0 : i32, i32
  }
  func.func @transform_2(%arg0: i32) -> (i32, i32) {
    %c0_i32 = arith.constant 0 : i32
    %c0_i32_0 = arith.constant 0 : i32
    %c0_i32_1 = arith.constant 0 : i32
    return %c0_i32, %c0_i32_0 : i32, i32
  }
  func.func @transform_3(%arg0: i32) -> (i32, i32) {
    %c0_i32 = arith.constant 0 : i32
    %c0_i32_0 = arith.constant 0 : i32
    %c0_i32_1 = arith.constant 0 : i32
    return %c0_i32, %c0_i32_0 : i32, i32
  }
  func.func @transform_4(%arg0: i32) -> (i32, i32) {
    %c0_i32 = arith.constant 0 : i32
    %c0_i32_0 = arith.constant 0 : i32
    %c0_i32_1 = arith.constant 0 : i32
    return %c0_i32, %c0_i32_0 : i32, i32
  }
  func.func @transform_5(%arg0: i32) -> (i32, i32) {
    %c0_i32 = arith.constant 0 : i32
    %c0_i32_0 = arith.constant 0 : i32
    %c0_i32_1 = arith.constant 0 : i32
    return %c0_i32, %c0_i32_0 : i32, i32
  }
  func.func @transform_6(%arg0: i32) -> (i32, i32) {
    %c0_i32 = arith.constant 0 : i32
    %c0_i32_0 = arith.constant 0 : i32
    %c0_i32_1 = arith.constant 0 : i32
    return %c0_i32, %c0_i32_0 : i32, i32
  }
  func.func @transform_7(%arg0: i32) -> (i32, i32) {
    %c0_i32 = arith.constant 0 : i32
    %c0_i32_0 = arith.constant 0 : i32
    %c0_i32_1 = arith.constant 0 : i32
    return %c0_i32, %c0_i32_0 : i32, i32
  }
  func.func @transform_8(%arg0: i32) -> (i32, i32) {
    %c0_i32 = arith.constant 0 : i32
    %c0_i32_0 = arith.constant 0 : i32
    %c0_i32_1 = arith.constant 0 : i32
    return %c0_i32, %c0_i32_0 : i32, i32
  }
  func.func @transform_9(%arg0: i32) -> (i32, i32) {
    %c0_i32 = arith.constant 0 : i32
    %c0_i32_0 = arith.constant 0 : i32
    return %arg0, %c0_i32 : i32, i32
  }
}

</mosaic_0001>

<llo_original>
// kernel: mlp3_forward.1
$region0: #{mlp3_forward.1}
  #allocation0 [shape = 'u32[]', space=smem, size = 0x4, offset = 0x4, fixed_abs, tag = 'smem constant byte address 0x4 - core index']
  #allocation1 [shape = 'u32[144,128]{1,0:T(1,128)}', space=vmem, size = 0x12000, scoped, tag = 'internal scratch']
  %s0 = inlined_call_operand.vmem [shape: f32[2,768], index: 0, kind: input, shape index: {}]
  %s1 = inlined_call_operand.hbm [shape: bf16[768,128], index: 1, kind: input, shape index: {}]
  %s2 = inlined_call_operand.vmem [shape: f32[1,128], index: 2, kind: input, shape index: {}]
  %s3 = inlined_call_operand.hbm [shape: bf16[128,128], index: 3, kind: input, shape index: {}]
  %s4 = inlined_call_operand.vmem [shape: f32[1,128], index: 4, kind: input, shape index: {}]
  %s5 = inlined_call_operand.hbm [shape: bf16[128,128], index: 5, kind: input, shape index: {}]
  %s6 = inlined_call_operand.vmem [shape: f32[1,128], index: 6, kind: input, shape index: {}]
  %s7 = inlined_call_operand.hbm [shape: bf16[128,128], index: 7, kind: input, shape index: {}]
  %s8 = inlined_call_operand.vmem [shape: f32[1,128], index: 8, kind: input, shape index: {}]
  %s9 = inlined_call_operand.vmem [shape: bf16[2,128], index: 9, kind: output, shape index: {}]
  %s10 = sld [smem:[#allocation0]]
  $region62: #{mlp3_forward.1} parent=0
    _
  %s12 = ssub.s32 1, %s10
  %s13 = scalar_select 0, %s12, %s10
  $region1: #{mlp3_forward.1} parent=0
    #allocation2 [shape = 'u8[196608]{0}', space=vmem, size = 0x30000, scoped, tag = 'input window, operand 1, single buffered']
    #allocation3 [shape = 's32[1]{0}', space=sflag, size = 0x4, scoped, tag = 'scoped memory for mlp3_forward.1']
    #allocation4 [shape = 'u8[32768]{0}', space=vmem, size = 0x8000, scoped, tag = 'input window, operand 3, single buffered']
    #allocation5 [shape = 's32[1]{0}', space=sflag, size = 0x4, scoped, tag = 'scoped memory for mlp3_forward.1']
    #allocation6 [shape = 'u8[32768]{0}', space=vmem, size = 0x8000, scoped, tag = 'input window, operand 5, single buffered']
    #allocation7 [shape = 'u8[32768]{0}', space=vmem, size = 0x8000, scoped, tag = 'input window, operand 7, single buffered']
    #allocation8 [shape = 's32[1]{0}', space=sflag, size = 0x4, scoped, tag = 'scoped memory for mlp3_forward.1']
    %14 = vsyncpa [#allocation3], 0
    %15 = vsyncpa [#allocation5], 0
    %16 = vsyncpa [#allocation8], 0
    // Predicated region
    $region2: #{mlp3_forward.1} parent=1 // pred_check
      _
    $region3: #{mlp3_forward.1} parent=1 // pred_check_branch
      %18 = sbr.rel (0) target = $region5
    $region4: #{mlp3_forward.1} parent=1 // pred_region
      _
    $region5: #{mlp3_forward.1} parent=1 // pred_fallthru
      _
    // Predicated region
    $region6: #{mlp3_forward.1} parent=1 // pred_check
      _
    $region7: #{mlp3_forward.1} parent=1 // pred_check_branch
      %20 = sbr.rel (0) target = $region9
    $region8: #{mlp3_forward.1} parent=1 // pred_region
      %s22 = ssub.s32 6144, 6144
      %23 = vsyncadd [#allocation3], %s22
      %s24 = sshll.u32 [#allocation2], 4
      %s25 = int_to_ptr.vmem [resolvable:$true] %s24
      %30 = dma.hbm_to_vmem [thread:$0]  %s1, 6144, %s25, [#allocation3], 64, 64, 4
    $region9: #{mlp3_forward.1} parent=1 // pred_fallthru
      _
    // Predicated region
    $region10: #{mlp3_forward.1} parent=1 // pred_check
      _
    $region11: #{mlp3_forward.1} parent=1 // pred_check_branch
      %32 = sbr.rel (0) target = $region13
    $region12: #{mlp3_forward.1} parent=1 // pred_region
      _
    $region13: #{mlp3_forward.1} parent=1 // pred_fallthru
      _
    // Predicated region
    $region14: #{mlp3_forward.1} parent=1 // pred_check
      _
    $region15: #{mlp3_forward.1} parent=1 // pred_check_branch
      %34 = sbr.rel (0) target = $region17
    $region16: #{mlp3_forward.1} parent=1 // pred_region
      %s36 = ssub.s32 1024, 1024
      %37 = vsyncadd [#allocation5], %s36
      %s38 = sshll.u32 [#allocation4], 4
      %s39 = int_to_ptr.vmem [resolvable:$true] %s38
      %44 = dma.hbm_to_vmem [thread:$0]  %s3, 1024, %s39, [#allocation5], 64, 64, 4
    $region17: #{mlp3_forward.1} parent=1 // pred_fallthru
      _
    // Predicated region
    $region18: #{mlp3_forward.1} parent=1 // pred_check
      _
    $region19: #{mlp3_forward.1} parent=1 // pred_check_branch
      %46 = sbr.rel (0) target = $region21
    $region20: #{mlp3_forward.1} parent=1 // pred_region
      _
    $region21: #{mlp3_forward.1} parent=1 // pred_fallthru
      _
    // Predicated region
    $region22: #{mlp3_forward.1} parent=1 // pred_check
      _
    $region23: #{mlp3_forward.1} parent=1 // pred_check_branch
      %48 = sbr.rel (0) target = $region25
    $region24: #{mlp3_forward.1} parent=1 // pred_region
      %s50 = ssub.s32 1024, 1024
      %51 = vsyncadd [#allocation5], %s50
      %s52 = sshll.u32 [#allocation6], 4
      %s53 = int_to_ptr.vmem [resolvable:$true] %s52
      %58 = dma.hbm_to_vmem [thread:$0]  %s5, 1024, %s53, [#allocation5], 64, 64, 4
    $region25: #{mlp3_forward.1} parent=1 // pred_fallthru
      _
    // Predicated region
    $region26: #{mlp3_forward.1} parent=1 // pred_check
      _
    $region27: #{mlp3_forward.1} parent=1 // pred_check_branch
      %60 = sbr.rel (0) target = $region29
    $region28: #{mlp3_forward.1} parent=1 // pred_region
      _
    $region29: #{mlp3_forward.1} parent=1 // pred_fallthru
      _
    // Predicated region
    $region30: #{mlp3_forward.1} parent=1 // pred_check
      _
    $region31: #{mlp3_forward.1} parent=1 // pred_check_branch
      %62 = sbr.rel (0) target = $region33
    $region32: #{mlp3_forward.1} parent=1 // pred_region
      %s64 = ssub.s32 1024, 1024
      %65 = vsyncadd [#allocation8], %s64
      %s66 = sshll.u32 [#allocation7], 4
      %s67 = int_to_ptr.vmem [resolvable:$true] %s66
      %72 = dma.hbm_to_vmem [thread:$0]  %s7, 1024, %s67, [#allocation8], 64, 64, 4
    $region33: #{mlp3_forward.1} parent=1 // pred_fallthru
      _
    // Predicated region
    $region34: #{mlp3_forward.1} parent=1 // pred_check
      _
    $region35: #{mlp3_forward.1} parent=1 // pred_check_branch
      %74 = sbr.rel (0) target = $region37
    $region36: #{mlp3_forward.1} parent=1 // pred_region
      _
    $region37: #{mlp3_forward.1} parent=1 // pred_fallthru
      _
    // Predicated region
    $region38: #{mlp3_forward.1} parent=1 // pred_check
      _
    $region39: #{mlp3_forward.1} parent=1 // pred_check_branch
      %76 = sbr.rel (0) target = $region41
    $region40: #{mlp3_forward.1} parent=1 // pred_region
      %77 = dma.done [#allocation3], 6144
    $region41: #{mlp3_forward.1} parent=1 // pred_fallthru
      _
    // Predicated region
    $region42: #{mlp3_forward.1} parent=1 // pred_check
      _
    $region43: #{mlp3_forward.1} parent=1 // pred_check_branch
      %79 = sbr.rel (0) target = $region45
    $region44: #{mlp3_forward.1} parent=1 // pred_region
      %80 = dma.done [#allocation5], 1024
    $region45: #{mlp3_forward.1} parent=1 // pred_fallthru
      _
    // Predicated region
    $region46: #{mlp3_forward.1} parent=1 // pred_check
      _
    $region47: #{mlp3_forward.1} parent=1 // pred_check_branch
      %82 = sbr.rel (0) target = $region49
    $region48: #{mlp3_forward.1} parent=1 // pred_region
      %83 = dma.done [#allocation5], 1024
    $region49: #{mlp3_forward.1} parent=1 // pred_fallthru
      _
    // Predicated region
    $region50: #{mlp3_forward.1} parent=1 // pred_check
      _
    $region51: #{mlp3_forward.1} parent=1 // pred_check_branch
      %85 = sbr.rel (0) target = $region53
    $region52: #{mlp3_forward.1} parent=1 // pred_region
      %86 = dma.done [#allocation8], 1024
    $region53: #{mlp3_forward.1} parent=1 // pred_fallthru
      _
    %v88 = vld [vmem:[%s0] sm:$0xff]
    %v89 = vld [vmem:[%s0 + $0x8] sm:$0xf]
    %v92 = vcombine.high %v88, %v88
    %v94 = vunpack.c.l.s4 1983009808
    %v95 = vunpack.c.0.s8 %v94
    %v96 = vlaneseq
    %v97 = vshrl.u32 %v96, 7
    %v98 = vsub.s32 %v95, %v97
    %v99 = vrot.slane %v88, %v98
    %v101 = vunpack.c.l.s4 1983009808
    %v102 = vunpack.c.0.s8 %v101
    %v103 = vlaneseq
    %v104 = vshrl.u32 %v103, 7
    %v105 = vsub.s32 %v102, %v104
    %v106 = vrot.slane %v92, %v105
    %v107 = vcombine.high %v99, %v99
    %v108 = vcombine.high %v106, %v106
    %v110 = vunpack.c.l.s4 1983009808
    %v111 = vunpack.c.0.s8 %v110
    %v112 = vlaneseq
    %v113 = vshrl.u32 %v112, 7
    %v114 = vsub.s32 %v111, %v113
    %v115 = vrot.slane %v89, %v114
    %v116 = vcombine.high %v115, %v115
    %v123 = vpack.c.bf16 %v99, %v99
    %v124 = vpack.c.bf16 %v107, %v107
    %v125 = vpack.c.bf16 %v106, %v106
    %v126 = vpack.c.bf16 %v108, %v108
    %v127 = vpack.c.bf16 %v115, %v115
    %v128 = vpack.c.bf16 %v116, %v116
    %v129 = vld [vmem:[#allocation2] sm:$0xf]
    %v130 = vld [vmem:[#allocation2 + $0x4] sm:$0xf]
    %v131 = vld [vmem:[#allocation2 + $0x8] sm:$0xf]
    %v132 = vld [vmem:[#allocation2 + $0xc] sm:$0xf]
    %v133 = vld [vmem:[#allocation2 + $0x10] sm:$0xf]
    %v134 = vld [vmem:[#allocation2 + $0x14] sm:$0xf]
    %v135 = vld [vmem:[#allocation2 + $0x18] sm:$0xf]
    %v136 = vld [vmem:[#allocation2 + $0x1c] sm:$0xf]
    %v137 = vld [vmem:[#allocation2 + $0x20] sm:$0xf]
    %v138 = vld [vmem:[#allocation2 + $0x24] sm:$0xf]
    %v139 = vld [vmem:[#allocation2 + $0x28] sm:$0xf]
    %v140 = vld [vmem:[#allocation2 + $0x2c] sm:$0xf]
    %v141 = vld [vmem:[#allocation2 + $0x30] sm:$0xf]
    %v142 = vld [vmem:[#allocation2 + $0x34] sm:$0xf]
    %v143 = vld [vmem:[#allocation2 + $0x38] sm:$0xf]
    %v144 = vld [vmem:[#allocation2 + $0x3c] sm:$0xf]
    %v145 = vld [vmem:[#allocation2 + $0x40] sm:$0xf]
    %v146 = vld [vmem:[#allocation2 + $0x44] sm:$0xf]
    %v147 = vld [vmem:[#allocation2 + $0x48] sm:$0xf]
    %v148 = vld [vmem:[#allocation2 + $0x4c] sm:$0xf]
    %v149 = vld [vmem:[#allocation2 + $0x50] sm:$0xf]
    %v150 = vld [vmem:[#allocation2 + $0x54] sm:$0xf]
    %v151 = vld [vmem:[#allocation2 + $0x58] sm:$0xf]
    %v152 = vld [vmem:[#allocation2 + $0x5c] sm:$0xf]
    %v153 = vld [vmem:[#allocation2 + $0x60] sm:$0xf]
    %v154 = vld [vmem:[#allocation2 + $0x64] sm:$0xf]
    %v155 = vld [vmem:[#allocation2 + $0x68] sm:$0xf]
    %v156 = vld [vmem:[#allocation2 + $0x6c] sm:$0xf]
    %v157 = vld [vmem:[#allocation2 + $0x70] sm:$0xf]
    %v158 = vld [vmem:[#allocation2 + $0x74] sm:$0xf]
    %v159 = vld [vmem:[#allocation2 + $0x78] sm:$0xf]
    %v160 = vld [vmem:[#allocation2 + $0x7c] sm:$0xf]
    %v161 = vld [vmem:[#allocation2 + $0x80] sm:$0xf]
    %v162 = vld [vmem:[#allocation2 + $0x84] sm:$0xf]
    %v163 = vld [vmem:[#allocation2 + $0x88] sm:$0xf]
    %v164 = vld [vmem:[#allocation2 + $0x8c] sm:$0xf]
    %v165 = vld [vmem:[#allocation2 + $0x90] sm:$0xf]
    %v166 = vld [vmem:[#allocation2 + $0x94] sm:$0xf]
    %v167 = vld [vmem:[#allocation2 + $0x98] sm:$0xf]
    %v168 = vld [vmem:[#allocation2 + $0x9c] sm:$0xf]
    %v169 = vld [vmem:[#allocation2 + $0xa0] sm:$0xf]
    %v170 = vld [vmem:[#allocation2 + $0xa4] sm:$0xf]
    %v171 = vld [vmem:[#allocation2 + $0xa8] sm:$0xf]
    %v172 = vld [vmem:[#allocation2 + $0xac] sm:$0xf]
    %v173 = vld [vmem:[#allocation2 + $0xb0] sm:$0xf]
    %v174 = vld [vmem:[#allocation2 + $0xb4] sm:$0xf]
    %v175 = vld [vmem:[#allocation2 + $0xb8] sm:$0xf]
    %v176 = vld [vmem:[#allocation2 + $0xbc] sm:$0xf]
    %v177 = vld [vmem:[#allocation2 + $0xc0] sm:$0xf]
    %v178 = vld [vmem:[#allocation2 + $0xc4] sm:$0xf]
    %v179 = vld [vmem:[#allocation2 + $0xc8] sm:$0xf]
    %v180 = vld [vmem:[#allocation2 + $0xcc] sm:$0xf]
    %v181 = vld [vmem:[#allocation2 + $0xd0] sm:$0xf]
    %v182 = vld [vmem:[#allocation2 + $0xd4] sm:$0xf]
    %v183 = vld [vmem:[#allocation2 + $0xd8] sm:$0xf]
    %v184 = vld [vmem:[#allocation2 + $0xdc] sm:$0xf]
    %v185 = vld [vmem:[#allocation2 + $0xe0] sm:$0xf]
    %v186 = vld [vmem:[#allocation2 + $0xe4] sm:$0xf]
    %v187 = vld [vmem:[#allocation2 + $0xe8] sm:$0xf]
    %v188 = vld [vmem:[#allocation2 + $0xec] sm:$0xf]
    %v189 = vld [vmem:[#allocation2 + $0xf0] sm:$0xf]
    %v190 = vld [vmem:[#allocation2 + $0xf4] sm:$0xf]
    %v191 = vld [vmem:[#allocation2 + $0xf8] sm:$0xf]
    %v192 = vld [vmem:[#allocation2 + $0xfc] sm:$0xf]
    %v193 = vld [vmem:[#allocation2 + $0x100] sm:$0xf]
    %v194 = vld [vmem:[#allocation2 + $0x104] sm:$0xf]
    %v195 = vld [vmem:[#allocation2 + $0x108] sm:$0xf]
    %v196 = vld [vmem:[#allocation2 + $0x10c] sm:$0xf]
    %v197 = vld [vmem:[#allocation2 + $0x110] sm:$0xf]
    %v198 = vld [vmem:[#allocation2 + $0x114] sm:$0xf]
    %v199 = vld [vmem:[#allocation2 + $0x118] sm:$0xf]
    %v200 = vld [vmem:[#allocation2 + $0x11c] sm:$0xf]
    %v201 = vld [vmem:[#allocation2 + $0x120] sm:$0xf]
    %v202 = vld [vmem:[#allocation2 + $0x124] sm:$0xf]
    %v203 = vld [vmem:[#allocation2 + $0x128] sm:$0xf]
    %v204 = vld [vmem:[#allocation2 + $0x12c] sm:$0xf]
    %v205 = vld [vmem:[#allocation2 + $0x130] sm:$0xf]
    %v206 = vld [vmem:[#allocation2 + $0x134] sm:$0xf]
    %v207 = vld [vmem:[#allocation2 + $0x138] sm:$0xf]
    %v208 = vld [vmem:[#allocation2 + $0x13c] sm:$0xf]
    %v209 = vld [vmem:[#allocation2 + $0x140] sm:$0xf]
    %v210 = vld [vmem:[#allocation2 + $0x144] sm:$0xf]
    %v211 = vld [vmem:[#allocation2 + $0x148] sm:$0xf]
    %v212 = vld [vmem:[#allocation2 + $0x14c] sm:$0xf]
    %v213 = vld [vmem:[#allocation2 + $0x150] sm:$0xf]
    %v214 = vld [vmem:[#allocation2 + $0x154] sm:$0xf]
    %v215 = vld [vmem:[#allocation2 + $0x158] sm:$0xf]
    %v216 = vld [vmem:[#allocation2 + $0x15c] sm:$0xf]
    %v217 = vld [vmem:[#allocation2 + $0x160] sm:$0xf]
    %v218 = vld [vmem:[#allocation2 + $0x164] sm:$0xf]
    %v219 = vld [vmem:[#allocation2 + $0x168] sm:$0xf]
    %v220 = vld [vmem:[#allocation2 + $0x16c] sm:$0xf]
    %v221 = vld [vmem:[#allocation2 + $0x170] sm:$0xf]
    %v222 = vld [vmem:[#allocation2 + $0x174] sm:$0xf]
    %v223 = vld [vmem:[#allocation2 + $0x178] sm:$0xf]
    %v224 = vld [vmem:[#allocation2 + $0x17c] sm:$0xf]
    %v225 = vld [vmem:[%s2] sm:$0x1]
    %v227 = vlaneseq
    %v228 = vshrl.u32 %v227, 7
    %v229 = vsub.s32 0, %v228
    %v230 = vrot.slane %v225, %v229
    %v328 = vunpack.c.l.b16 %v129
    %v329 = vunpack.c.l.b16 %v130
    %v330 = vunpack.c.l.b16 %v131
    %v331 = vunpack.c.l.b16 %v132
    %v332 = vunpack.c.l.b16 %v133
    %v333 = vunpack.c.l.b16 %v134
    %v334 = vunpack.c.l.b16 %v135
    %v335 = vunpack.c.l.b16 %v136
    %v336 = vunpack.c.l.b16 %v137
    %v337 = vunpack.c.l.b16 %v138
    %v338 = vunpack.c.l.b16 %v139
    %v339 = vunpack.c.l.b16 %v140
    %v340 = vunpack.c.l.b16 %v141
    %v341 = vunpack.c.l.b16 %v142
    %v342 = vunpack.c.l.b16 %v143
    %v343 = vunpack.c.l.b16 %v144
    %v344 = vunpack.c.l.b16 %v145
    %v345 = vunpack.c.l.b16 %v146
    %v346 = vunpack.c.l.b16 %v147
    %v347 = vunpack.c.l.b16 %v148
    %v348 = vunpack.c.l.b16 %v149
    %v349 = vunpack.c.l.b16 %v150
    %v350 = vunpack.c.l.b16 %v151
    %v351 = vunpack.c.l.b16 %v152
    %v352 = vunpack.c.l.b16 %v153
    %v353 = vunpack.c.l.b16 %v154
    %v354 = vunpack.c.l.b16 %v155
    %v355 = vunpack.c.l.b16 %v156
    %v356 = vunpack.c.l.b16 %v157
    %v357 = vunpack.c.l.b16 %v158
    %v358 = vunpack.c.l.b16 %v159
    %v359 = vunpack.c.l.b16 %v160
    %v360 = vunpack.c.l.b16 %v161
    %v361 = vunpack.c.l.b16 %v162
    %v362 = vunpack.c.l.b16 %v163
    %v363 = vunpack.c.l.b16 %v164
    %v364 = vunpack.c.l.b16 %v165
    %v365 = vunpack.c.l.b16 %v166
    %v366 = vunpack.c.l.b16 %v167
    %v367 = vunpack.c.l.b16 %v168
    %v368 = vunpack.c.l.b16 %v169
    %v369 = vunpack.c.l.b16 %v170
    %v370 = vunpack.c.l.b16 %v171
    %v371 = vunpack.c.l.b16 %v172
    %v372 = vunpack.c.l.b16 %v173
    %v373 = vunpack.c.l.b16 %v174
    %v374 = vunpack.c.l.b16 %v175
    %v375 = vunpack.c.l.b16 %v176
    %v376 = vunpack.c.l.b16 %v177
    %v377 = vunpack.c.l.b16 %v178
    %v378 = vunpack.c.l.b16 %v179
    %v379 = vunpack.c.l.b16 %v180
    %v380 = vunpack.c.l.b16 %v181
    %v381 = vunpack.c.l.b16 %v182
    %v382 = vunpack.c.l.b16 %v183
    %v383 = vunpack.c.l.b16 %v184
    %v384 = vunpack.c.l.b16 %v185
    %v385 = vunpack.c.l.b16 %v186
    %v386 = vunpack.c.l.b16 %v187
    %v387 = vunpack.c.l.b16 %v188
    %v388 = vunpack.c.l.b16 %v189
    %v389 = vunpack.c.l.b16 %v190
    %v390 = vunpack.c.l.b16 %v191
    %v391 = vunpack.c.l.b16 %v192
    %v392 = vunpack.c.l.b16 %v193
    %v393 = vunpack.c.l.b16 %v194
    %v394 = vunpack.c.l.b16 %v195
    %v395 = vunpack.c.l.b16 %v196
    %v396 = vunpack.c.l.b16 %v197
    %v397 = vunpack.c.l.b16 %v198
    %v398 = vunpack.c.l.b16 %v199
    %v399 = vunpack.c.l.b16 %v200
    %v400 = vunpack.c.l.b16 %v201
    %v401 = vunpack.c.l.b16 %v202
    %v402 = vunpack.c.l.b16 %v203
    %v403 = vunpack.c.l.b16 %v204
    %v404 = vunpack.c.l.b16 %v205
    %v405 = vunpack.c.l.b16 %v206
    %v406 = vunpack.c.l.b16 %v207
    %v407 = vunpack.c.l.b16 %v208
    %v408 = vunpack.c.l.b16 %v209
    %v409 = vunpack.c.l.b16 %v210
    %v410 = vunpack.c.l.b16 %v211
    %v411 = vunpack.c.l.b16 %v212
    %v412 = vunpack.c.l.b16 %v213
    %v413 = vunpack.c.l.b16 %v214
    %v414 = vunpack.c.l.b16 %v215
    %v415 = vunpack.c.l.b16 %v216
    %v416 = vunpack.c.l.b16 %v217
    %v417 = vunpack.c.l.b16 %v218
    %v418 = vunpack.c.l.b16 %v219
    %v419 = vunpack.c.l.b16 %v220
    %v420 = vunpack.c.l.b16 %v221
    %v421 = vunpack.c.l.b16 %v222
    %v422 = vunpack.c.l.b16 %v223
    %v423 = vunpack.c.l.b16 %v224
    %v424 = vpack.c.b16 %v329, %v328
    %v425 = vpack.c.b16 %v331, %v330
    %v426 = vpack.c.b16 %v333, %v332
    %v427 = vpack.c.b16 %v335, %v334
    %v428 = vpack.c.b16 %v337, %v336
    %v429 = vpack.c.b16 %v339, %v338
    %v430 = vpack.c.b16 %v341, %v340
    %v431 = vpack.c.b16 %v343, %v342
    %v432 = vpack.c.b16 %v345, %v344
    %v433 = vpack.c.b16 %v347, %v346
    %v434 = vpack.c.b16 %v349, %v348
    %v435 = vpack.c.b16 %v351, %v350
    %v436 = vpack.c.b16 %v353, %v352
    %v437 = vpack.c.b16 %v355, %v354
    %v438 = vpack.c.b16 %v357, %v356
    %v439 = vpack.c.b16 %v359, %v358
    %v440 = vpack.c.b16 %v361, %v360
    %v441 = vpack.c.b16 %v363, %v362
    %v442 = vpack.c.b16 %v365, %v364
    %v443 = vpack.c.b16 %v367, %v366
    %v444 = vpack.c.b16 %v369, %v368
    %v445 = vpack.c.b16 %v371, %v370
    %v446 = vpack.c.b16 %v373, %v372
    %v447 = vpack.c.b16 %v375, %v374
    %v448 = vpack.c.b16 %v377, %v376
    %v449 = vpack.c.b16 %v379, %v378
    %v450 = vpack.c.b16 %v381, %v380
    %v451 = vpack.c.b16 %v383, %v382
    %v452 = vpack.c.b16 %v385, %v384
    %v453 = vpack.c.b16 %v387, %v386
    %v454 = vpack.c.b16 %v389, %v388
    %v455 = vpack.c.b16 %v391, %v390
    %v456 = vpack.c.b16 %v393, %v392
    %v457 = vpack.c.b16 %v395, %v394
    %v458 = vpack.c.b16 %v397, %v396
    %v459 = vpack.c.b16 %v399, %v398
    %v460 = vpack.c.b16 %v401, %v400
    %v461 = vpack.c.b16 %v403, %v402
    %v462 = vpack.c.b16 %v405, %v404
    %v463 = vpack.c.b16 %v407, %v406
    %v464 = vpack.c.b16 %v409, %v408
    %v465 = vpack.c.b16 %v411, %v410
    %v466 = vpack.c.b16 %v413, %v412
    %v467 = vpack.c.b16 %v415, %v414
    %v468 = vpack.c.b16 %v417, %v416
    %v469 = vpack.c.b16 %v419, %v418
    %v470 = vpack.c.b16 %v421, %v420
    %v471 = vpack.c.b16 %v423, %v422
    %520 = vmatprep.subr.bf16.mxu0 0
    %521 = vmatpush1.bf16.msra.mxu0 %v424
    %522 = vmatprep.subr.bf16.mxu0 0
    %523 = vmatpush1.bf16.msra.mxu0 %v425
    %524 = vmatprep.subr.bf16.mxu0 0
    %525 = vmatpush1.bf16.msra.mxu0 %v426
    %526 = vmatprep.subr.bf16.mxu0 0
    %527 = vmatpush1.bf16.msra.mxu0 %v427
    %528 = vmatprep.subr.bf16.mxu0 0
    %529 = vmatpush1.bf16.msra.mxu0 %v428
    %530 = vmatprep.subr.bf16.mxu0 0
    %531 = vmatpush1.bf16.msra.mxu0 %v429
    %532 = vmatprep.subr.bf16.mxu0 0
    %533 = vmatpush1.bf16.msra.mxu0 %v430
    %534 = vmatprep.subr.bf16.mxu0 0
    %535 = vmatpush1.bf16.msra.mxu0 %v431
    %536 = vmatprep.subr.bf16.mxu0 0
    %537 = vmatpush1.bf16.msra.mxu0 %v432
    %538 = vmatprep.subr.bf16.mxu0 0
    %539 = vmatpush1.bf16.msra.mxu0 %v433
    %540 = vmatprep.subr.bf16.mxu0 0
    %541 = vmatpush1.bf16.msra.mxu0 %v434
    %542 = vmatprep.subr.bf16.mxu0 0
    %543 = vmatpush1.bf16.msra.mxu0 %v435
    %544 = vmatprep.subr.bf16.mxu0 0
    %545 = vmatpush1.bf16.msra.mxu0 %v436
    %546 = vmatprep.subr.bf16.mxu0 0
    %547 = vmatpush1.bf16.msra.mxu0 %v437
    %548 = vmatprep.subr.bf16.mxu0 0
    %549 = vmatpush1.bf16.msra.mxu0 %v438
    %550 = vmatprep.subr.bf16.mxu0 0
    %551 = vmatpush1.bf16.msra.mxu0 %v439
    %552 = vmatprep.mubr.bf16.mxu0 %v124
    %553 = vmatmul.mubr.bf16.gmra.mrb[0].mxu0 %v123
    %v554 = vpop.f32.mrb[0].mxu0
    %v555 = vadd.f32 %v230, %v554
    %v556 = vpop.f32.mrb[0].mxu0
    %v557 = vpop.f32.mrb[0].mxu0
    %v558 = vpop.f32.mrb[0].mxu0
    %559 = vdwg.mxu0
    %560 = vmatprep.subr.bf16.mxu0 0
    %561 = vmatpush1.bf16.msra.mxu0 %v440
    %562 = vmatprep.subr.bf16.mxu0 0
    %563 = vmatpush1.bf16.msra.mxu0 %v441
    %564 = vmatprep.subr.bf16.mxu0 0
    %565 = vmatpush1.bf16.msra.mxu0 %v442
    %566 = vmatprep.subr.bf16.mxu0 0
    %567 = vmatpush1.bf16.msra.mxu0 %v443
    %568 = vmatprep.subr.bf16.mxu0 0
    %569 = vmatpush1.bf16.msra.mxu0 %v444
    %570 = vmatprep.subr.bf16.mxu0 0
    %571 = vmatpush1.bf16.msra.mxu0 %v445
    %572 = vmatprep.subr.bf16.mxu0 0
    %573 = vmatpush1.bf16.msra.mxu0 %v446
    %574 = vmatprep.subr.bf16.mxu0 0
    %575 = vmatpush1.bf16.msra.mxu0 %v447
    %576 = vmatprep.subr.bf16.mxu0 0
    %577 = vmatpush1.bf16.msra.mxu0 %v448
    %578 = vmatprep.subr.bf16.mxu0 0
    %579 = vmatpush1.bf16.msra.mxu0 %v449
    %580 = vmatprep.subr.bf16.mxu0 0
    %581 = vmatpush1.bf16.msra.mxu0 %v450
    %582 = vmatprep.subr.bf16.mxu0 0
    %583 = vmatpush1.bf16.msra.mxu0 %v451
    %584 = vmatprep.subr.bf16.mxu0 0
    %585 = vmatpush1.bf16.msra.mxu0 %v452
    %586 = vmatprep.subr.bf16.mxu0 0
    %587 = vmatpush1.bf16.msra.mxu0 %v453
    %588 = vmatprep.subr.bf16.mxu0 0
    %589 = vmatpush1.bf16.msra.mxu0 %v454
    %590 = vmatprep.subr.bf16.mxu0 0
    %591 = vmatpush1.bf16.msra.mxu0 %v455
    %592 = vmatprep.mubr.bf16.mxu0 %v126
    %593 = vmatmul.mubr.bf16.gmra.mrb[0].mxu0 %v125
    %v594 = vpop.f32.mrb[0].mxu0
    %v595 = vadd.f32 %v555, %v594
    %v596 = vpop.f32.mrb[0].mxu0
    %v597 = vpop.f32.mrb[0].mxu0
    %v598 = vpop.f32.mrb[0].mxu0
    %599 = vdwg.mxu0
    %600 = vmatprep.subr.bf16.mxu0 0
    %601 = vmatpush1.bf16.msra.mxu0 %v456
    %602 = vmatprep.subr.bf16.mxu0 0
    %603 = vmatpush1.bf16.msra.mxu0 %v457
    %604 = vmatprep.subr.bf16.mxu0 0
    %605 = vmatpush1.bf16.msra.mxu0 %v458
    %606 = vmatprep.subr.bf16.mxu0 0
    %607 = vmatpush1.bf16.msra.mxu0 %v459
    %608 = vmatprep.subr.bf16.mxu0 0
    %609 = vmatpush1.bf16.msra.mxu0 %v460
    %610 = vmatprep.subr.bf16.mxu0 0
    %611 = vmatpush1.bf16.msra.mxu0 %v461
    %612 = vmatprep.subr.bf16.mxu0 0
    %613 = vmatpush1.bf16.msra.mxu0 %v462
    %614 = vmatprep.subr.bf16.mxu0 0
    %615 = vmatpush1.bf16.msra.mxu0 %v463
    %616 = vmatprep.subr.bf16.mxu0 0
    %617 = vmatpush1.bf16.msra.mxu0 %v464
    %618 = vmatprep.subr.bf16.mxu0 0
    %619 = vmatpush1.bf16.msra.mxu0 %v465
    %620 = vmatprep.subr.bf16.mxu0 0
    %621 = vmatpush1.bf16.msra.mxu0 %v466
    %622 = vmatprep.subr.bf16.mxu0 0
    %623 = vmatpush1.bf16.msra.mxu0 %v467
    %624 = vmatprep.subr.bf16.mxu0 0
    %625 = vmatpush1.bf16.msra.mxu0 %v468
    %626 = vmatprep.subr.bf16.mxu0 0
    %627 = vmatpush1.bf16.msra.mxu0 %v469
    %628 = vmatprep.subr.bf16.mxu0 0
    %629 = vmatpush1.bf16.msra.mxu0 %v470
    %630 = vmatprep.subr.bf16.mxu0 0
    %631 = vmatpush1.bf16.msra.mxu0 %v471
    %632 = vmatprep.mubr.bf16.mxu0 %v128
    %633 = vmatmul.mubr.bf16.gmra.mrb[0].mxu0 %v127
    %v634 = vpop.f32.mrb[0].mxu0
    %v635 = vadd.f32 %v595, %v634
    %v636 = vpop.f32.mrb[0].mxu0
    %v637 = vpop.f32.mrb[0].mxu0
    %v638 = vpop.f32.mrb[0].mxu0
    %639 = vdwg.mxu0
    %v640 = vmax.f32 %v635, 0.0
    %v641 = vpack.c.bf16 %v640, %v640
    %v642 = vld [vmem:[#allocation4] sm:$0xf]
    %v643 = vld [vmem:[#allocation4 + $0x4] sm:$0xf]
    %v644 = vld [vmem:[#allocation4 + $0x8] sm:$0xf]
    %v645 = vld [vmem:[#allocation4 + $0xc] sm:$0xf]
    %v646 = vld [vmem:[#allocation4 + $0x10] sm:$0xf]
    %v647 = vld [vmem:[#allocation4 + $0x14] sm:$0xf]
    %v648 = vld [vmem:[#allocation4 + $0x18] sm:$0xf]
    %v649 = vld [vmem:[#allocation4 + $0x1c] sm:$0xf]
    %v650 = vld [vmem:[#allocation4 + $0x20] sm:$0xf]
    %v651 = vld [vmem:[#allocation4 + $0x24] sm:$0xf]
    %v652 = vld [vmem:[#allocation4 + $0x28] sm:$0xf]
    %v653 = vld [vmem:[#allocation4 + $0x2c] sm:$0xf]
    %v654 = vld [vmem:[#allocation4 + $0x30] sm:$0xf]
    %v655 = vld [vmem:[#allocation4 + $0x34] sm:$0xf]
    %v656 = vld [vmem:[#allocation4 + $0x38] sm:$0xf]
    %v657 = vld [vmem:[#allocation4 + $0x3c] sm:$0xf]
    %v658 = vld [vmem:[%s4] sm:$0x1]
    %v660 = vlaneseq
    %v661 = vshrl.u32 %v660, 7
    %v662 = vsub.s32 0, %v661
    %v663 = vrot.slane %v658, %v662
    %v681 = vunpack.c.l.b16 %v642
    %v682 = vunpack.c.l.b16 %v643
    %v683 = vunpack.c.l.b16 %v644
    %v684 = vunpack.c.l.b16 %v645
    %v685 = vunpack.c.l.b16 %v646
    %v686 = vunpack.c.l.b16 %v647
    %v687 = vunpack.c.l.b16 %v648
    %v688 = vunpack.c.l.b16 %v649
    %v689 = vunpack.c.l.b16 %v650
    %v690 = vunpack.c.l.b16 %v651
    %v691 = vunpack.c.l.b16 %v652
    %v692 = vunpack.c.l.b16 %v653
    %v693 = vunpack.c.l.b16 %v654
    %v694 = vunpack.c.l.b16 %v655
    %v695 = vunpack.c.l.b16 %v656
    %v696 = vunpack.c.l.b16 %v657
    %v697 = vpack.c.b16 %v682, %v681
    %v698 = vpack.c.b16 %v684, %v683
    %v699 = vpack.c.b16 %v686, %v685
    %v700 = vpack.c.b16 %v688, %v687
    %v701 = vpack.c.b16 %v690, %v689
    %v702 = vpack.c.b16 %v692, %v691
    %v703 = vpack.c.b16 %v694, %v693
    %v704 = vpack.c.b16 %v696, %v695
    %713 = vmatprep.subr.bf16.mxu0 0
    %714 = vmatpush1.bf16.msra.mxu0 %v697
    %715 = vmatprep.subr.bf16.mxu0 0
    %716 = vmatpush1.bf16.msra.mxu0 %v698
    %717 = vmatprep.subr.bf16.mxu0 0
    %718 = vmatpush1.bf16.msra.mxu0 %v699
    %719 = vmatprep.subr.bf16.mxu0 0
    %720 = vmatpush1.bf16.msra.mxu0 %v700
    %721 = vmatprep.subr.bf16.mxu0 0
    %722 = vmatpush1.bf16.msra.mxu0 %v701
    %723 = vmatprep.subr.bf16.mxu0 0
    %724 = vmatpush1.bf16.msra.mxu0 %v702
    %725 = vmatprep.subr.bf16.mxu0 0
    %726 = vmatpush1.bf16.msra.mxu0 %v703
    %727 = vmatprep.subr.bf16.mxu0 0
    %728 = vmatpush1.bf16.msra.mxu0 %v704
    %729 = vmatprep.subr.bf16.mxu0 0
    %730 = vmatpush1.bf16.msra.mxu0 0
    %731 = vmatprep.subr.bf16.mxu0 0
    %732 = vmatpush1.bf16.msra.mxu0 0
    %733 = vmatprep.subr.bf16.mxu0 0
    %734 = vmatpush1.bf16.msra.mxu0 0
    %735 = vmatprep.subr.bf16.mxu0 0
    %736 = vmatpush1.bf16.msra.mxu0 0
    %737 = vmatprep.subr.bf16.mxu0 0
    %738 = vmatpush1.bf16.msra.mxu0 0
    %739 = vmatprep.subr.bf16.mxu0 0
    %740 = vmatpush1.bf16.msra.mxu0 0
    %741 = vmatprep.subr.bf16.mxu0 0
    %742 = vmatpush1.bf16.msra.mxu0 0
    %743 = vmatprep.subr.bf16.mxu0 0
    %744 = vmatpush1.bf16.msra.mxu0 0
    %745 = vmatprep.mubr.bf16.mxu0 0
    %746 = vmatmul.mubr.bf16.gmra.mrb[0].mxu0 %v641
    %v747 = vpop.f32.mrb[0].mxu0
    %v748 = vadd.f32 %v663, %v747
    %v749 = vpop.f32.mrb[0].mxu0
    %v750 = vpop.f32.mrb[0].mxu0
    %v751 = vpop.f32.mrb[0].mxu0
    %752 = vdwg.mxu0
    %v753 = vmax.f32 %v748, 0.0
    %v754 = vpack.c.bf16 %v753, %v753
    %v755 = vld [vmem:[#allocation6] sm:$0xf]
    %v756 = vld [vmem:[#allocation6 + $0x4] sm:$0xf]
    %v757 = vld [vmem:[#allocation6 + $0x8] sm:$0xf]
    %v758 = vld [vmem:[#allocation6 + $0xc] sm:$0xf]
    %v759 = vld [vmem:[#allocation6 + $0x10] sm:$0xf]
    %v760 = vld [vmem:[#allocation6 + $0x14] sm:$0xf]
    %v761 = vld [vmem:[#allocation6 + $0x18] sm:$0xf]
    %v762 = vld [vmem:[#allocation6 + $0x1c] sm:$0xf]
    %v763 = vld [vmem:[#allocation6 + $0x20] sm:$0xf]
    %v764 = vld [vmem:[#allocation6 + $0x24] sm:$0xf]
    %v765 = vld [vmem:[#allocation6 + $0x28] sm:$0xf]
    %v766 = vld [vmem:[#allocation6 + $0x2c] sm:$0xf]
    %v767 = vld [vmem:[#allocation6 + $0x30] sm:$0xf]
    %v768 = vld [vmem:[#allocation6 + $0x34] sm:$0xf]
    %v769 = vld [vmem:[#allocation6 + $0x38] sm:$0xf]
    %v770 = vld [vmem:[#allocation6 + $0x3c] sm:$0xf]
    %v771 = vld [vmem:[%s6] sm:$0x1]
    %v773 = vlaneseq
    %v774 = vshrl.u32 %v773, 7
    %v775 = vsub.s32 0, %v774
    %v776 = vrot.slane %v771, %v775
    %v794 = vunpack.c.l.b16 %v755
    %v795 = vunpack.c.l.b16 %v756
    %v796 = vunpack.c.l.b16 %v757
    %v797 = vunpack.c.l.b16 %v758
    %v798 = vunpack.c.l.b16 %v759
    %v799 = vunpack.c.l.b16 %v760
    %v800 = vunpack.c.l.b16 %v761
    %v801 = vunpack.c.l.b16 %v762
    %v802 = vunpack.c.l.b16 %v763
    %v803 = vunpack.c.l.b16 %v764
    %v804 = vunpack.c.l.b16 %v765
    %v805 = vunpack.c.l.b16 %v766
    %v806 = vunpack.c.l.b16 %v767
    %v807 = vunpack.c.l.b16 %v768
    %v808 = vunpack.c.l.b16 %v769
    %v809 = vunpack.c.l.b16 %v770
    %v810 = vpack.c.b16 %v795, %v794
    %v811 = vpack.c.b16 %v797, %v796
    %v812 = vpack.c.b16 %v799, %v798
    %v813 = vpack.c.b16 %v801, %v800
    %v814 = vpack.c.b16 %v803, %v802
    %v815 = vpack.c.b16 %v805, %v804
    %v816 = vpack.c.b16 %v807, %v806
    %v817 = vpack.c.b16 %v809, %v808
    %826 = vmatprep.subr.bf16.mxu0 0
    %827 = vmatpush1.bf16.msra.mxu0 %v810
    %828 = vmatprep.subr.bf16.mxu0 0
    %829 = vmatpush1.bf16.msra.mxu0 %v811
    %830 = vmatprep.subr.bf16.mxu0 0
    %831 = vmatpush1.bf16.msra.mxu0 %v812
    %832 = vmatprep.subr.bf16.mxu0 0
    %833 = vmatpush1.bf16.msra.mxu0 %v813
    %834 = vmatprep.subr.bf16.mxu0 0
    %835 = vmatpush1.bf16.msra.mxu0 %v814
    %836 = vmatprep.subr.bf16.mxu0 0
    %837 = vmatpush1.bf16.msra.mxu0 %v815
    %838 = vmatprep.subr.bf16.mxu0 0
    %839 = vmatpush1.bf16.msra.mxu0 %v816
    %840 = vmatprep.subr.bf16.mxu0 0
    %841 = vmatpush1.bf16.msra.mxu0 %v817
    %842 = vmatprep.subr.bf16.mxu0 0
    %843 = vmatpush1.bf16.msra.mxu0 0
    %844 = vmatprep.subr.bf16.mxu0 0
    %845 = vmatpush1.bf16.msra.mxu0 0
    %846 = vmatprep.subr.bf16.mxu0 0
    %847 = vmatpush1.bf16.msra.mxu0 0
    %848 = vmatprep.subr.bf16.mxu0 0
    %849 = vmatpush1.bf16.msra.mxu0 0
    %850 = vmatprep.subr.bf16.mxu0 0
    %851 = vmatpush1.bf16.msra.mxu0 0
    %852 = vmatprep.subr.bf16.mxu0 0
    %853 = vmatpush1.bf16.msra.mxu0 0
    %854 = vmatprep.subr.bf16.mxu0 0
    %855 = vmatpush1.bf16.msra.mxu0 0
    %856 = vmatprep.subr.bf16.mxu0 0
    %857 = vmatpush1.bf16.msra.mxu0 0
    %858 = vmatprep.mubr.bf16.mxu0 0
    %859 = vmatmul.mubr.bf16.gmra.mrb[0].mxu0 %v754
    %v860 = vpop.f32.mrb[0].mxu0
    %v861 = vadd.f32 %v776, %v860
    %v862 = vpop.f32.mrb[0].mxu0
    %v863 = vpop.f32.mrb[0].mxu0
    %v864 = vpop.f32.mrb[0].mxu0
    %865 = vdwg.mxu0
    %v866 = vmax.f32 %v861, 0.0
    %v867 = vpack.c.bf16 %v866, %v866
    %v868 = vld [vmem:[#allocation7] sm:$0xf]
    %v869 = vld [vmem:[#allocation7 + $0x4] sm:$0xf]
    %v870 = vld [vmem:[#allocation7 + $0x8] sm:$0xf]
    %v871 = vld [vmem:[#allocation7 + $0xc] sm:$0xf]
    %v872 = vld [vmem:[#allocation7 + $0x10] sm:$0xf]
    %v873 = vld [vmem:[#allocation7 + $0x14] sm:$0xf]
    %v874 = vld [vmem:[#allocation7 + $0x18] sm:$0xf]
    %v875 = vld [vmem:[#allocation7 + $0x1c] sm:$0xf]
    %v876 = vld [vmem:[#allocation7 + $0x20] sm:$0xf]
    %v877 = vld [vmem:[#allocation7 + $0x24] sm:$0xf]
    %v878 = vld [vmem:[#allocation7 + $0x28] sm:$0xf]
    %v879 = vld [vmem:[#allocation7 + $0x2c] sm:$0xf]
    %v880 = vld [vmem:[#allocation7 + $0x30] sm:$0xf]
    %v881 = vld [vmem:[#allocation7 + $0x34] sm:$0xf]
    %v882 = vld [vmem:[#allocation7 + $0x38] sm:$0xf]
    %v883 = vld [vmem:[#allocation7 + $0x3c] sm:$0xf]
    %v884 = vld [vmem:[%s8] sm:$0x1]
    %v886 = vlaneseq
    %v887 = vshrl.u32 %v886, 7
    %v888 = vsub.s32 0, %v887
    %v889 = vrot.slane %v884, %v888
    %v907 = vunpack.c.l.b16 %v868
    %v908 = vunpack.c.l.b16 %v869
    %v909 = vunpack.c.l.b16 %v870
    %v910 = vunpack.c.l.b16 %v871
    %v911 = vunpack.c.l.b16 %v872
    %v912 = vunpack.c.l.b16 %v873
    %v913 = vunpack.c.l.b16 %v874
    %v914 = vunpack.c.l.b16 %v875
    %v915 = vunpack.c.l.b16 %v876
    %v916 = vunpack.c.l.b16 %v877
    %v917 = vunpack.c.l.b16 %v878
    %v918 = vunpack.c.l.b16 %v879
    %v919 = vunpack.c.l.b16 %v880
    %v920 = vunpack.c.l.b16 %v881
    %v921 = vunpack.c.l.b16 %v882
    %v922 = vunpack.c.l.b16 %v883
    %v923 = vpack.c.b16 %v908, %v907
    %v924 = vpack.c.b16 %v910, %v909
    %v925 = vpack.c.b16 %v912, %v911
    %v926 = vpack.c.b16 %v914, %v913
    %v927 = vpack.c.b16 %v916, %v915
    %v928 = vpack.c.b16 %v918, %v917
    %v929 = vpack.c.b16 %v920, %v919
    %v930 = vpack.c.b16 %v922, %v921
    %939 = vmatprep.subr.bf16.mxu0 0
    %940 = vmatpush1.bf16.msra.mxu0 %v923
    %941 = vmatprep.subr.bf16.mxu0 0
    %942 = vmatpush1.bf16.msra.mxu0 %v924
    %943 = vmatprep.subr.bf16.mxu0 0
    %944 = vmatpush1.bf16.msra.mxu0 %v925
    %945 = vmatprep.subr.bf16.mxu0 0
    %946 = vmatpush1.bf16.msra.mxu0 %v926
    %947 = vmatprep.subr.bf16.mxu0 0
    %948 = vmatpush1.bf16.msra.mxu0 %v927
    %949 = vmatprep.subr.bf16.mxu0 0
    %950 = vmatpush1.bf16.msra.mxu0 %v928
    %951 = vmatprep.subr.bf16.mxu0 0
    %952 = vmatpush1.bf16.msra.mxu0 %v929
    %953 = vmatprep.subr.bf16.mxu0 0
    %954 = vmatpush1.bf16.msra.mxu0 %v930
    %955 = vmatprep.subr.bf16.mxu0 0
    %956 = vmatpush1.bf16.msra.mxu0 0
    %957 = vmatprep.subr.bf16.mxu0 0
    %958 = vmatpush1.bf16.msra.mxu0 0
    %959 = vmatprep.subr.bf16.mxu0 0
    %960 = vmatpush1.bf16.msra.mxu0 0
    %961 = vmatprep.subr.bf16.mxu0 0
    %962 = vmatpush1.bf16.msra.mxu0 0
    %963 = vmatprep.subr.bf16.mxu0 0
    %964 = vmatpush1.bf16.msra.mxu0 0
    %965 = vmatprep.subr.bf16.mxu0 0
    %966 = vmatpush1.bf16.msra.mxu0 0
    %967 = vmatprep.subr.bf16.mxu0 0
    %968 = vmatpush1.bf16.msra.mxu0 0
    %969 = vmatprep.subr.bf16.mxu0 0
    %970 = vmatpush1.bf16.msra.mxu0 0
    %971 = vmatprep.mubr.bf16.mxu0 0
    %972 = vmatmul.mubr.bf16.gmra.mrb[0].mxu0 %v867
    %v973 = vpop.f32.mrb[0].mxu0
    %v974 = vadd.f32 %v889, %v973
    %v975 = vpop.f32.mrb[0].mxu0
    %v976 = vpop.f32.mrb[0].mxu0
    %v977 = vpop.f32.mrb[0].mxu0
    %978 = vdwg.mxu0
    %v979 = vpack.c.bf16 %v974, %v974
    %980 = vst [vmem:[%s9] sm:$0x1] %v979
    // Predicated region
    $region54: #{mlp3_forward.1} parent=1 // pred_check
      _
    $region55: #{mlp3_forward.1} parent=1 // pred_check_branch
      %982 = sbr.rel (0) target = $region57
    $region56: #{mlp3_forward.1} parent=1 // pred_region
      _
    $region57: #{mlp3_forward.1} parent=1 // pred_fallthru
      _
    // Predicated region
    $region58: #{mlp3_forward.1} parent=1 // pred_check
      _
    $region59: #{mlp3_forward.1} parent=1 // pred_check_branch
      %984 = sbr.rel (0) target = $region61
    $region60: #{mlp3_forward.1} parent=1 // pred_region
      _
    $region61: #{mlp3_forward.1} parent=1 // pred_fallthru
      _
    %985 = vsyncpa [#allocation3], 1
    %986 = vsyncpa [#allocation5], 1
    %987 = vsyncpa [#allocation8], 1

</llo_original>
